<compile_context>
chip_gen: v5e
topology: v5e:2x2
jax: 0.10.0
libtpu: 0.0.40
codegen_flags: <defaults>
</compile_context>

<pallas_src>
import math

import numpy as np
import jax
import jax.numpy as jnp
from jax.experimental import pallas as pl
from jax.experimental.pallas import tpu as pltpu


def _fourier_kernel(pos_ref, tab_ref, out_ref):
    # pos_ref: (TM, 8)  f32   rows are [x, y, 1, 0, 0, 0, 0, 0]
    # tab_ref: (8, F)   f32   rows are [freq_x; freq_y; bias; zeros]
    # out_ref: (TM, F)  f32   cos half and sin half in one lane-dense store
    loc = jnp.dot(pos_ref[...], tab_ref[...],
                  preferred_element_type=jnp.float32,
                  precision=jax.lax.Precision.HIGHEST)
    out_ref[...] = jnp.cos(loc)


def fourier_emb(positions, dimension=128, margin=0.2, tm=512):
    """Pallas implementation of FourierEmb.forward."""
    *O, D = positions.shape
    assert D == 2
    n_freqs = (dimension // 2) ** 0.5
    assert int(n_freqs ** 2 * 2) == dimension
    nf = int(math.ceil(n_freqs))          # matches torch.arange(float) semantics
    nf2 = nf * nf
    out_dim = 2 * nf2                     # == dimension when dim//2 is a perfect square
    width = 1.0 + 2.0 * margin

    # Combined frequency / bias table. Column c (< nf2): cos term for
    # (i=c//nf, j=c%nf); column nf2+c: the matching sin term realized as
    # cos(loc - pi/2).  margin is folded into the bias row.
    k = np.arange(nf2)
    fx = 2.0 * np.pi * (k // nf) / width
    fy = 2.0 * np.pi * (k % nf) / width
    fx2 = np.concatenate([fx, fx])
    fy2 = np.concatenate([fy, fy])
    phase = np.concatenate([np.zeros(nf2), np.full(nf2, -0.5 * np.pi)])
    bias = margin * (fx2 + fy2) + phase
    tab_np = np.zeros((8, out_dim), dtype=np.float32)
    tab_np[0] = fx2
    tab_np[1] = fy2
    tab_np[2] = bias
    tab = jnp.asarray(tab_np)

    pos2d = positions.reshape(-1, 2).astype(jnp.float32)
    n = pos2d.shape[0]
    # Augment rows to [x, y, 1, 0...] so the bias rides the matmul for free.
    pos_aug = jnp.concatenate(
        [pos2d, jnp.ones((n, 1), jnp.float32), jnp.zeros((n, 5), jnp.float32)],
        axis=-1)                                            # (n, 8)

    # Big lane-dense tiles; clamp so tiny inputs don't over-pad.
    tm = max(8, min(int(tm), pl.cdiv(n, 8) * 8))
    n_pad = pl.cdiv(n, tm) * tm
    if n_pad != n:
        pos_aug = jnp.pad(pos_aug, ((0, n_pad - n), (0, 0)))

    cost = pl.CostEstimate(
        flops=2 * n_pad * 8 * out_dim,
        transcendentals=n_pad * out_dim,
        bytes_accessed=n_pad * 8 * 4 + 8 * out_dim * 4 + n_pad * out_dim * 4,
    )

    out = pl.pallas_call(
        _fourier_kernel,
        out_shape=jax.ShapeDtypeStruct((n_pad, out_dim), jnp.float32),
        grid_spec=pltpu.PrefetchScalarGridSpec(
            num_scalar_prefetch=0,
            grid=(n_pad // tm,),
            in_specs=[
                pl.BlockSpec((tm, 8), lambda i: (i, 0)),
                pl.BlockSpec((8, out_dim), lambda i: (0, 0)),
            ],
            out_specs=pl.BlockSpec((tm, out_dim), lambda i: (i, 0)),
        ),
        compiler_params=pltpu.CompilerParams(
            dimension_semantics=("parallel",)),
        cost_estimate=cost,
    )(pos_aug, tab)

    out = out[:n]
    return out.reshape(*O, out_dim)


def fourier_emb_ref(positions, dimension=128, margin=0.2):
    """Plain-JAX reference mirroring the PyTorch forward exactly."""
    *O, D = positions.shape
    assert D == 2
    n_freqs = (dimension // 2) ** 0.5
    nf = int(math.ceil(n_freqs))
    width = 1.0 + 2.0 * margin
    freqs_y = jnp.arange(nf, dtype=jnp.float32)
    freqs_x = freqs_y[:, None]
    pos = positions.astype(jnp.float32) + margin
    p_x = 2 * math.pi * freqs_x / width               # (nf, 1)
    p_y = 2 * math.pi * freqs_y / width               # (nf,)
    pos = pos[..., None, None, :]                     # (*O, 1, 1, 2)
    loc = (pos[..., 0] * p_x + pos[..., 1] * p_y).reshape(*O, -1)
    return jnp.concatenate([jnp.cos(loc), jnp.sin(loc)], axis=-1)


if __name__ == "__main__":
    key = jax.random.PRNGKey(0)
    # Small shapes: batch=2, 16 sensors, each with a 2-D position in [0, 1].
    # dimension=128 -> n_freqs = sqrt(64) = 8 (perfect square, as the module requires).
    B, C, dimension = 2, 16, 128
    positions = jax.random.uniform(key, (B, C, 2), dtype=jnp.float32)

    out = fourier_emb(positions, dimension=dimension, margin=0.2)
    out = jax.block_until_ready(out)

    ref = fourier_emb_ref(positions, dimension=dimension, margin=0.2)
    assert out.shape == (B, C, dimension), out.shape
    np.testing.assert_allclose(np.asarray(out), np.asarray(ref), atol=1e-4, rtol=1e-4)

    print("KERNEL_OK")
</pallas_src>

<mosaic_0001>
module attributes {stable_mosaic.version = 11 : i64} {
  func.func @_fourier_kernel(%arg0: i32, %arg1: memref<32x8xf32, #tpu.memory_space<vmem>>, %arg2: memref<8x128xf32, #tpu.memory_space<vmem>>, %arg3: memref<32x128xf32, #tpu.memory_space<vmem>>) attributes {dimension_semantics = [#tpu.dimension_semantics<parallel>], iteration_bounds = array<i64: 1>, scalar_prefetch = 0 : i64, scratch_operands = 0 : i64, tpu.core_type = #tpu.core_type<tc>, window_params = [{transform_indices = @transform_0, window_bounds = array<i64: 32, 8>}, {pipeline_mode = #tpu.pipeline_mode<synchronous>, transform_indices = @transform_1, window_bounds = array<i64: 8, 128>}, {transform_indices = @transform_2, window_bounds = array<i64: 32, 128>}]} {
    %c0 = arith.constant 0 : index
    %c0_0 = arith.constant 0 : index
    %0 = vector.load %arg1[%c0, %c0_0] : memref<32x8xf32, #tpu.memory_space<vmem>>, vector<32x8xf32>
    %c0_1 = arith.constant 0 : index
    %c0_2 = arith.constant 0 : index
    %1 = vector.load %arg2[%c0_1, %c0_2] : memref<8x128xf32, #tpu.memory_space<vmem>>, vector<8x128xf32>
    %cst = arith.constant dense<0.000000e+00> : vector<32x128xf32>
    %2 = tpu.matmul %0, %1, %cst {dimension_numbers = #tpu.dot_dimension_numbers<[1], [0], [0], [1], [0, 0, 1, 1], [], []>, precision = #tpu.contract_precision<fp32>} : vector<32x8xf32>, vector<8x128xf32>, vector<32x128xf32> -> vector<32x128xf32>
    %3 = math.cos %2 : vector<32x128xf32>
    %c0_3 = arith.constant 0 : index
    %c0_4 = arith.constant 0 : index
    %4 = vector.load %arg3[%c0_3, %c0_4] : memref<32x128xf32, #tpu.memory_space<vmem>>, vector<32x128xf32>
    tpu.vector_store %arg3[%c0_3, %c0_4], %3 {strides = array<i32>} : memref<32x128xf32, #tpu.memory_space<vmem>>, vector<32x128xf32>,
    return
  }
  func.func @transform_0(%arg0: i32) -> (i32, i32) {
    %c0_i32 = arith.constant 0 : i32
    %c0_i32_0 = arith.constant 0 : i32
    return %arg0, %c0_i32 : i32, i32
  }
  func.func @transform_1(%arg0: i32) -> (i32, i32) {
    %c0_i32 = arith.constant 0 : i32
    %c0_i32_0 = arith.constant 0 : i32
    %c0_i32_1 = arith.constant 0 : i32
    return %c0_i32, %c0_i32_0 : i32, i32
  }
  func.func @transform_2(%arg0: i32) -> (i32, i32) {
    %c0_i32 = arith.constant 0 : i32
    %c0_i32_0 = arith.constant 0 : i32
    return %arg0, %c0_i32 : i32, i32
  }
}

</mosaic_0001>

<llo_original>
// kernel: tpu_custom_call.1
$region0: #{tpu_custom_call.1}
  #allocation0 [shape = 'u32[]', space=smem, size = 0x4, offset = 0x4, fixed_abs, tag = 'smem constant byte address 0x4 - core index']
  #allocation1 [shape = 'u32[72,128]{1,0:T(1,128)}', space=vmem, size = 0x9000, scoped, tag = 'internal scratch']
  %s0 = inlined_call_operand.vmem [shape: f32[32,8], index: 0, kind: input, shape index: {}]
  %s1 = inlined_call_operand.vmem [shape: f32[8,128], index: 1, kind: input, shape index: {}]
  %s2 = inlined_call_operand.hbm [shape: f32[32,128], index: 2, kind: output, shape index: {}]
  %s3 = sld [smem:[#allocation0]]
  $region18: #{tpu_custom_call.1} parent=0
    _
  %s5 = ssub.s32 1, %s3
  %s6 = scalar_select 0, %s5, %s3
  $region1: #{tpu_custom_call.1} parent=0
    #allocation2 [shape = 'u8[16384]{0}', space=vmem, size = 0x4000, scoped, tag = 'output window, operand 0, single buffered']
    #allocation3 [shape = 's32[1]{0}', space=sflag, size = 0x4, scoped, tag = 'scoped memory for tpu_custom_call.1']
    %7 = vsyncpa [#allocation3], 0
    // Predicated region
    $region2: #{tpu_custom_call.1} parent=1 // pred_check
      _
    $region3: #{tpu_custom_call.1} parent=1 // pred_check_branch
      %9 = sbr.rel (0) target = $region5
    $region4: #{tpu_custom_call.1} parent=1 // pred_region
      _
    $region5: #{tpu_custom_call.1} parent=1 // pred_fallthru
      _
    // Predicated region
    $region6: #{tpu_custom_call.1} parent=1 // pred_check
      _
    $region7: #{tpu_custom_call.1} parent=1 // pred_check_branch
      %11 = sbr.rel (0) target = $region9
    $region8: #{tpu_custom_call.1} parent=1 // pred_region
      _
    $region9: #{tpu_custom_call.1} parent=1 // pred_fallthru
      _
    %v12 = vld [vmem:[%s0] sm:$0xff]
    %v13 = vld [vmem:[%s0 + $0x8] sm:$0xff]
    %v14 = vld [vmem:[%s0 + $0x10] sm:$0xff]
    %v15 = vld [vmem:[%s0 + $0x18] sm:$0xff]
    %v16 = vld [vmem:[%s1] sm:$0xff]
    %vm17 = vcmask 64512
    %v19 = vsel %vm17, %v12, 0
    %v22 = vsel %vm17, %v13, 0
    %v25 = vsel %vm17, %v14, 0
    %v28 = vsel %vm17, %v15, 0
    %30 = vmatpush.msra.mxu0 0.0
    %31 = vmatpush.msra.mxu0 0.0
    %32 = vmatpush.msra.mxu0 0.0
    %33 = vmatpush.msra.mxu0 0.0
    %34 = vmatpush.msra.mxu0 0.0
    %35 = vmatpush.msra.mxu0 0.0
    %36 = vmatpush.msra.mxu0 0.0
    %37 = vmatpush.msra.mxu0 0.0
    %38 = vmatpush.msra.mxu0 0.0
    %39 = vmatpush.msra.mxu0 0.0
    %40 = vmatpush.msra.mxu0 0.0
    %41 = vmatpush.msra.mxu0 0.0
    %42 = vmatpush.msra.mxu0 0.0
    %43 = vmatpush.msra.mxu0 0.0
    %44 = vmatpush.msra.mxu0 0.0
    %v45 = vand.u32 %v16, 4294901760
    %46 = vmatpush.msra.mxu0 %v45
    %v47 = vand.u32 %v19, 4294901760
    %v48 = vsub.f32 %v19, %v47
    %v49 = vand.u32 %v48, 4294901760
    %v50 = vsub.f32 %v48, %v49
    %v51 = vand.u32 %v50, 4294901760
    %52 = vmatmul.f32.gmra.mxu0 %v51
    %v53 = vpop.f32.mrf.mxu0
    %v54 = vadd.f32 0.0, %v53
    %v55 = vand.u32 %v22, 4294901760
    %v56 = vsub.f32 %v22, %v55
    %v57 = vand.u32 %v56, 4294901760
    %v58 = vsub.f32 %v56, %v57
    %v59 = vand.u32 %v58, 4294901760
    %60 = vmatmul.f32.gmra.mxu0 %v59
    %v61 = vpop.f32.mrf.mxu0
    %v62 = vadd.f32 0.0, %v61
    %v63 = vand.u32 %v25, 4294901760
    %v64 = vsub.f32 %v25, %v63
    %v65 = vand.u32 %v64, 4294901760
    %v66 = vsub.f32 %v64, %v65
    %v67 = vand.u32 %v66, 4294901760
    %68 = vmatmul.f32.gmra.mxu0 %v67
    %v69 = vpop.f32.mrf.mxu0
    %v70 = vadd.f32 0.0, %v69
    %v71 = vand.u32 %v28, 4294901760
    %v72 = vsub.f32 %v28, %v71
    %v73 = vand.u32 %v72, 4294901760
    %v74 = vsub.f32 %v72, %v73
    %v75 = vand.u32 %v74, 4294901760
    %76 = vmatmul.f32.gmra.mxu0 %v75
    %v77 = vpop.f32.mrf.mxu0
    %v78 = vadd.f32 0.0, %v77
    %79 = vdwg.mxu0
    %80 = vmatpush.msra.mxu0 0.0
    %81 = vmatpush.msra.mxu0 0.0
    %82 = vmatpush.msra.mxu0 0.0
    %83 = vmatpush.msra.mxu0 0.0
    %84 = vmatpush.msra.mxu0 0.0
    %85 = vmatpush.msra.mxu0 0.0
    %86 = vmatpush.msra.mxu0 0.0
    %87 = vmatpush.msra.mxu0 0.0
    %88 = vmatpush.msra.mxu0 0.0
    %89 = vmatpush.msra.mxu0 0.0
    %90 = vmatpush.msra.mxu0 0.0
    %91 = vmatpush.msra.mxu0 0.0
    %92 = vmatpush.msra.mxu0 0.0
    %93 = vmatpush.msra.mxu0 0.0
    %94 = vmatpush.msra.mxu0 0.0
    %v95 = vand.u32 %v16, 4294901760
    %v96 = vsub.f32 %v16, %v95
    %v97 = vand.u32 %v96, 4294901760
    %v98 = vsub.f32 %v96, %v97
    %v99 = vand.u32 %v98, 4294901760
    %100 = vmatpush.msra.mxu0 %v99
    %v101 = vand.u32 %v19, 4294901760
    %102 = vmatmul.f32.gmra.mxu0 %v101
    %v103 = vpop.f32.mrf.mxu0
    %v104 = vadd.f32 %v54, %v103
    %v105 = vand.u32 %v22, 4294901760
    %106 = vmatmul.f32.gmra.mxu0 %v105
    %v107 = vpop.f32.mrf.mxu0
    %v108 = vadd.f32 %v62, %v107
    %v109 = vand.u32 %v25, 4294901760
    %110 = vmatmul.f32.gmra.mxu0 %v109
    %v111 = vpop.f32.mrf.mxu0
    %v112 = vadd.f32 %v70, %v111
    %v113 = vand.u32 %v28, 4294901760
    %114 = vmatmul.f32.gmra.mxu0 %v113
    %v115 = vpop.f32.mrf.mxu0
    %v116 = vadd.f32 %v78, %v115
    %117 = vdwg.mxu0
    %118 = vmatpush.msra.mxu0 0.0
    %119 = vmatpush.msra.mxu0 0.0
    %120 = vmatpush.msra.mxu0 0.0
    %121 = vmatpush.msra.mxu0 0.0
    %122 = vmatpush.msra.mxu0 0.0
    %123 = vmatpush.msra.mxu0 0.0
    %124 = vmatpush.msra.mxu0 0.0
    %125 = vmatpush.msra.mxu0 0.0
    %126 = vmatpush.msra.mxu0 0.0
    %127 = vmatpush.msra.mxu0 0.0
    %128 = vmatpush.msra.mxu0 0.0
    %129 = vmatpush.msra.mxu0 0.0
    %130 = vmatpush.msra.mxu0 0.0
    %131 = vmatpush.msra.mxu0 0.0
    %132 = vmatpush.msra.mxu0 0.0
    %v133 = vand.u32 %v16, 4294901760
    %v134 = vsub.f32 %v16, %v133
    %135 = vmatpush.msra.mxu0 %v134
    %v136 = vand.u32 %v19, 4294901760
    %v137 = vsub.f32 %v19, %v136
    %138 = vmatmul.f32.gmra.mxu0 %v137
    %v139 = vpop.f32.mrf.mxu0
    %v140 = vadd.f32 %v104, %v139
    %v141 = vand.u32 %v22, 4294901760
    %v142 = vsub.f32 %v22, %v141
    %143 = vmatmul.f32.gmra.mxu0 %v142
    %v144 = vpop.f32.mrf.mxu0
    %v145 = vadd.f32 %v108, %v144
    %v146 = vand.u32 %v25, 4294901760
    %v147 = vsub.f32 %v25, %v146
    %148 = vmatmul.f32.gmra.mxu0 %v147
    %v149 = vpop.f32.mrf.mxu0
    %v150 = vadd.f32 %v112, %v149
    %v151 = vand.u32 %v28, 4294901760
    %v152 = vsub.f32 %v28, %v151
    %153 = vmatmul.f32.gmra.mxu0 %v152
    %v154 = vpop.f32.mrf.mxu0
    %v155 = vadd.f32 %v116, %v154
    %156 = vdwg.mxu0
    %157 = vmatpush.msra.mxu0 0.0
    %158 = vmatpush.msra.mxu0 0.0
    %159 = vmatpush.msra.mxu0 0.0
    %160 = vmatpush.msra.mxu0 0.0
    %161 = vmatpush.msra.mxu0 0.0
    %162 = vmatpush.msra.mxu0 0.0
    %163 = vmatpush.msra.mxu0 0.0
    %164 = vmatpush.msra.mxu0 0.0
    %165 = vmatpush.msra.mxu0 0.0
    %166 = vmatpush.msra.mxu0 0.0
    %167 = vmatpush.msra.mxu0 0.0
    %168 = vmatpush.msra.mxu0 0.0
    %169 = vmatpush.msra.mxu0 0.0
    %170 = vmatpush.msra.mxu0 0.0
    %171 = vmatpush.msra.mxu0 0.0
    %v172 = vand.u32 %v16, 4294901760
    %173 = vmatpush.msra.mxu0 %v172
    %v174 = vand.u32 %v19, 4294901760
    %v175 = vsub.f32 %v19, %v174
    %v176 = vand.u32 %v175, 4294901760
    %177 = vmatmul.f32.gmra.mxu0 %v176
    %v178 = vpop.f32.mrf.mxu0
    %v179 = vadd.f32 %v140, %v178
    %v180 = vand.u32 %v22, 4294901760
    %v181 = vsub.f32 %v22, %v180
    %v182 = vand.u32 %v181, 4294901760
    %183 = vmatmul.f32.gmra.mxu0 %v182
    %v184 = vpop.f32.mrf.mxu0
    %v185 = vadd.f32 %v145, %v184
    %v186 = vand.u32 %v25, 4294901760
    %v187 = vsub.f32 %v25, %v186
    %v188 = vand.u32 %v187, 4294901760
    %189 = vmatmul.f32.gmra.mxu0 %v188
    %v190 = vpop.f32.mrf.mxu0
    %v191 = vadd.f32 %v150, %v190
    %v192 = vand.u32 %v28, 4294901760
    %v193 = vsub.f32 %v28, %v192
    %v194 = vand.u32 %v193, 4294901760
    %195 = vmatmul.f32.gmra.mxu0 %v194
    %v196 = vpop.f32.mrf.mxu0
    %v197 = vadd.f32 %v155, %v196
    %198 = vdwg.mxu0
    %199 = vmatpush.msra.mxu0 0.0
    %200 = vmatpush.msra.mxu0 0.0
    %201 = vmatpush.msra.mxu0 0.0
    %202 = vmatpush.msra.mxu0 0.0
    %203 = vmatpush.msra.mxu0 0.0
    %204 = vmatpush.msra.mxu0 0.0
    %205 = vmatpush.msra.mxu0 0.0
    %206 = vmatpush.msra.mxu0 0.0
    %207 = vmatpush.msra.mxu0 0.0
    %208 = vmatpush.msra.mxu0 0.0
    %209 = vmatpush.msra.mxu0 0.0
    %210 = vmatpush.msra.mxu0 0.0
    %211 = vmatpush.msra.mxu0 0.0
    %212 = vmatpush.msra.mxu0 0.0
    %213 = vmatpush.msra.mxu0 0.0
    %v214 = vand.u32 %v16, 4294901760
    %v215 = vsub.f32 %v16, %v214
    %v216 = vand.u32 %v215, 4294901760
    %217 = vmatpush.msra.mxu0 %v216
    %v218 = vand.u32 %v19, 4294901760
    %219 = vmatmul.f32.gmra.mxu0 %v218
    %v220 = vpop.f32.mrf.mxu0
    %v221 = vadd.f32 %v179, %v220
    %v222 = vand.u32 %v22, 4294901760
    %223 = vmatmul.f32.gmra.mxu0 %v222
    %v224 = vpop.f32.mrf.mxu0
    %v225 = vadd.f32 %v185, %v224
    %v226 = vand.u32 %v25, 4294901760
    %227 = vmatmul.f32.gmra.mxu0 %v226
    %v228 = vpop.f32.mrf.mxu0
    %v229 = vadd.f32 %v191, %v228
    %v230 = vand.u32 %v28, 4294901760
    %231 = vmatmul.f32.gmra.mxu0 %v230
    %v232 = vpop.f32.mrf.mxu0
    %v233 = vadd.f32 %v197, %v232
    %234 = vdwg.mxu0
    %235 = vmatpush.msra.mxu0 0.0
    %236 = vmatpush.msra.mxu0 0.0
    %237 = vmatpush.msra.mxu0 0.0
    %238 = vmatpush.msra.mxu0 0.0
    %239 = vmatpush.msra.mxu0 0.0
    %240 = vmatpush.msra.mxu0 0.0
    %241 = vmatpush.msra.mxu0 0.0
    %242 = vmatpush.msra.mxu0 0.0
    %243 = vmatpush.msra.mxu0 0.0
    %244 = vmatpush.msra.mxu0 0.0
    %245 = vmatpush.msra.mxu0 0.0
    %246 = vmatpush.msra.mxu0 0.0
    %247 = vmatpush.msra.mxu0 0.0
    %248 = vmatpush.msra.mxu0 0.0
    %249 = vmatpush.msra.mxu0 0.0
    %v250 = vand.u32 %v16, 4294901760
    %251 = vmatpush.msra.mxu0 %v250
    %v252 = vand.u32 %v19, 4294901760
    %253 = vmatmul.f32.gmra.mxu0 %v252
    %v254 = vpop.f32.mrf.mxu0
    %v255 = vadd.f32 %v221, %v254
    %v256 = vand.u32 %v22, 4294901760
    %257 = vmatmul.f32.gmra.mxu0 %v256
    %v258 = vpop.f32.mrf.mxu0
    %v259 = vadd.f32 %v225, %v258
    %v260 = vand.u32 %v25, 4294901760
    %261 = vmatmul.f32.gmra.mxu0 %v260
    %v262 = vpop.f32.mrf.mxu0
    %v263 = vadd.f32 %v229, %v262
    %v264 = vand.u32 %v28, 4294901760
    %265 = vmatmul.f32.gmra.mxu0 %v264
    %v266 = vpop.f32.mrf.mxu0
    %v267 = vadd.f32 %v233, %v266
    %268 = vdwg.mxu0
    %v269 = vand.u32 2147483647, %v255
    %vm270 = vcmp.le.f32.partialorder %v269, 0.7853982
    %vm271 = vcmp.lt.s32.totalorder %v255, 0
    %v272 = vand.u32 %v255, 2139095040
    %v273 = vshrl.u32 %v272, 23
    %v274 = vsub.s32 %v273, 127
    %v275 = vand.u32 2147483647, %v255
    %v276 = vand.u32 %v275, 8388607
    %v277 = vor.u32 %v276, 8388608
    %v278 = vsub.s32 0, %v277
    %v279 = vadd.s32 %v274, 1
    %vm280 = vcmp.gt.s32.totalorder %v279, 0
    %v281 = vsel %vm280, %v279, 0
    %v282 = vshrl.u32 %v281, 5
    %v283 = vand.u32 %v281, 31
    %v284 = vsub.s32 32, %v283
    %v285 = vshrl.u32 683565275, %v284
    %v286 = vshll.u32 683565275, %v283
    %v287 = vshrl.u32 2475754826, %v284
    %v288 = vor.u32 %v286, %v287
    %v289 = vshll.u32 2475754826, %v283
    %v290 = vshrl.u32 2131351028, %v284
    %v291 = vor.u32 %v289, %v290
    %v292 = vshll.u32 2131351028, %v283
    %v293 = vshrl.u32 2102212464, %v284
    %v294 = vor.u32 %v292, %v293
    %v295 = vshll.u32 2102212464, %v283
    %v296 = vshrl.u32 920167782, %v284
    %v297 = vor.u32 %v295, %v296
    %v298 = vshll.u32 920167782, %v283
    %v299 = vshrl.u32 1326507024, %v284
    %v300 = vor.u32 %v298, %v299
    %vm301 = vcmp.lt.s32.totalorder %v282, 1
    %vm302 = vcmp.lt.s32.totalorder %v282, 2
    %vm303 = vcmp.lt.s32.totalorder %v282, 3
    %vm304 = vcmp.lt.s32.totalorder %v282, 4
    %v305 = vsel %vm301, %v285, %v288
    %v306 = vsel %vm304, %v294, 2102212464
    %v307 = vsel %vm303, %v291, %v306
    %v308 = vsel %vm302, %v305, %v307
    %v309 = vsel %vm301, %v288, %v291
    %v310 = vsel %vm304, %v297, 920167782
    %v311 = vsel %vm303, %v294, %v310
    %v312 = vsel %vm302, %v309, %v311
    %v313 = vsel %vm301, %v291, %v294
    %v314 = vsel %vm304, %v300, 1326507024
    %v315 = vsel %vm303, %v297, %v314
    %v316 = vsel %vm302, %v313, %v315
    %v317 = vshll.u32 %v277, 8
    %v318 = vand.u32 %v317, 65535
    %v319 = vshrl.u32 %v317, 16
    %v320 = vand.u32 %v316, 65535
    %v321 = vshrl.u32 %v316, 16
    %v322 = vmul.u32 %v318, %v320
    %v323 = vmul.u32 %v318, %v321
    %v324 = vmul.u32 %v319, %v320
    %v325 = vmul.u32 %v319, %v321
    %v326 = vshll.u32 %v323, 16
    %v327 = vshrl.u32 %v323, 16
    %v328 = vshll.u32 %v324, 16
    %v329 = vshrl.u32 %v324, 16
    %vm330 = vc.u32 %v322, %v326
    %v331 = vsel %vm330, 1, 0
    %v332 = vadd.s32 %v322, %v326
    %v333 = vadd.s32 %v325, %v331
    %vm334 = vc.u32 %v332, %v328
    %v335 = vsel %vm334, 1, 0
    %v336 = vadd.s32 %v332, %v328
    %v337 = vadd.s32 %v333, %v335
    %v338 = vadd.s32 %v337, %v327
    %v339 = vadd.s32 %v338, %v329
    %v340 = vand.u32 %v317, 65535
    %v341 = vshrl.u32 %v317, 16
    %v342 = vand.u32 %v312, 65535
    %v343 = vshrl.u32 %v312, 16
    %v344 = vmul.u32 %v340, %v342
    %v345 = vmul.u32 %v340, %v343
    %v346 = vmul.u32 %v341, %v342
    %v347 = vmul.u32 %v341, %v343
    %v348 = vshll.u32 %v345, 16
    %v349 = vshrl.u32 %v345, 16
    %v350 = vshll.u32 %v346, 16
    %v351 = vshrl.u32 %v346, 16
    %vm352 = vc.u32 %v344, %v348
    %v353 = vsel %vm352, 1, 0
    %v354 = vadd.s32 %v344, %v348
    %v355 = vadd.s32 %v347, %v353
    %vm356 = vc.u32 %v354, %v350
    %v357 = vsel %vm356, 1, 0
    %v358 = vadd.s32 %v354, %v350
    %v359 = vadd.s32 %v355, %v357
    %v360 = vadd.s32 %v359, %v349
    %v361 = vadd.s32 %v360, %v351
    %v362 = vmul.u32 %v317, %v308
    %v363 = vadd.s32 %v339, %v358
    %vm364 = vc.u32 %v339, %v358
    %v365 = vadd.s32 %v361, 1
    %v366 = vsel %vm364, %v365, %v361
    %v367 = vadd.s32 %v362, %v366
    %v368 = vadd.s32 %v367, 536870912
    %v369 = vshrl.u32 %v368, 30
    %v370 = vshll.u32 %v369, 30
    %v371 = vsub.s32 %v367, %v370
    %vm372 = vcmp.lt.s32.totalorder %v371, 0
    %v373 = vsub.s32 0, %v371
    %v374 = vsel %vm372, %v373, %v371
    %v375 = vclz %v374
    %v376 = vsub.s32 %v375, 2
    %vm377 = vcmp.gt.s32.totalorder 0, %v376
    %v378 = vsel %vm377, 0, %v376
    %v379 = vsub.s32 32, %v378
    %v380 = vshll.u32 %v371, %v378
    %v381 = vshrl.u32 %v363, %v379
    %v382 = vor.u32 %v380, %v381
    %v383 = vsub.s32 4294967266, %v378
    %v384 = vadd.s32 %v383, 127
    %v385 = vshll.u32 %v384, 23
    %v386 = vor.u32 4788187, %v385
    %v387 = vand.u32 2147483647, %v386
    %v389 = vcvt.s32.f32 %v382
    %v390 = vmul.f32 %v389, %v387
    %v391 = vxor.u32 %v390, 2147483648
    %v392 = vsel %vm271, %v391, %v390
    %v393 = vsub.s32 4, %v369
    %v394 = vsel %vm271, %v393, %v369
    %v395 = vsel %vm270, %v255, %v392
    %v396 = vsel %vm270, 0, %v394
    %v397 = vmul.f32 %v395, %v395
    %v398 = vmul.f32 %v397, -0.001358992
    %v399 = vadd.f32 %v398, 0.041655596
    %v400 = vmul.f32 %v397, %v399
    %v401 = vadd.f32 %v400, -0.4999988
    %v402 = vmul.f32 %v397, %v401
    %v403 = vadd.f32 1.0, %v402
    %v404 = vmul.f32 %v395, %v395
    %v405 = vmul.f32 %v404, -0.00019511016
    %v406 = vadd.f32 %v405, 0.008332121
    %v407 = vmul.f32 %v404, %v406
    %v408 = vadd.f32 %v407, -0.16666654
    %v409 = vmul.f32 %v404, %v408
    %v410 = vadd.f32 %v409, 1.0
    %v411 = vmul.f32 %v410, %v395
    %vm412 = vweird.f32 %v255
    %v413 = vand.u32 %v396, 3
    %vm414 = vcmp.lt.s32.totalorder %v413, 2
    %vm415 = vcmp.eq.s32.totalorder %v413, 0
    %v416 = vxor.u32 %v411, 2147483648
    %v417 = vsel %vm415, %v403, %v416
    %vm418 = vcmp.eq.s32.totalorder %v413, 2
    %v419 = vxor.u32 %v403, 2147483648
    %v420 = vsel %vm418, %v419, %v411
    %v421 = vsel %vm414, %v417, %v420
    %v422 = vsel %vm412, nan, %v421
    %v423 = vand.u32 2147483647, %v259
    %vm424 = vcmp.le.f32.partialorder %v423, 0.7853982
    %vm425 = vcmp.lt.s32.totalorder %v259, 0
    %v426 = vand.u32 %v259, 2139095040
    %v427 = vshrl.u32 %v426, 23
    %v428 = vsub.s32 %v427, 127
    %v429 = vand.u32 2147483647, %v259
    %v430 = vand.u32 %v429, 8388607
    %v431 = vor.u32 %v430, 8388608
    %v432 = vsub.s32 0, %v431
    %v433 = vadd.s32 %v428, 1
    %vm434 = vcmp.gt.s32.totalorder %v433, 0
    %v435 = vsel %vm434, %v433, 0
    %v436 = vshrl.u32 %v435, 5
    %v437 = vand.u32 %v435, 31
    %v438 = vsub.s32 32, %v437
    %v439 = vshrl.u32 683565275, %v438
    %v440 = vshll.u32 683565275, %v437
    %v441 = vshrl.u32 2475754826, %v438
    %v442 = vor.u32 %v440, %v441
    %v443 = vshll.u32 2475754826, %v437
    %v444 = vshrl.u32 2131351028, %v438
    %v445 = vor.u32 %v443, %v444
    %v446 = vshll.u32 2131351028, %v437
    %v447 = vshrl.u32 2102212464, %v438
    %v448 = vor.u32 %v446, %v447
    %v449 = vshll.u32 2102212464, %v437
    %v450 = vshrl.u32 920167782, %v438
    %v451 = vor.u32 %v449, %v450
    %v452 = vshll.u32 920167782, %v437
    %v453 = vshrl.u32 1326507024, %v438
    %v454 = vor.u32 %v452, %v453
    %vm455 = vcmp.lt.s32.totalorder %v436, 1
    %vm456 = vcmp.lt.s32.totalorder %v436, 2
    %vm457 = vcmp.lt.s32.totalorder %v436, 3
    %vm458 = vcmp.lt.s32.totalorder %v436, 4
    %v459 = vsel %vm455, %v439, %v442
    %v460 = vsel %vm458, %v448, 2102212464
    %v461 = vsel %vm457, %v445, %v460
    %v462 = vsel %vm456, %v459, %v461
    %v463 = vsel %vm455, %v442, %v445
    %v464 = vsel %vm458, %v451, 920167782
    %v465 = vsel %vm457, %v448, %v464
    %v466 = vsel %vm456, %v463, %v465
    %v467 = vsel %vm455, %v445, %v448
    %v468 = vsel %vm458, %v454, 1326507024
    %v469 = vsel %vm457, %v451, %v468
    %v470 = vsel %vm456, %v467, %v469
    %v471 = vshll.u32 %v431, 8
    %v472 = vand.u32 %v471, 65535
    %v473 = vshrl.u32 %v471, 16
    %v474 = vand.u32 %v470, 65535
    %v475 = vshrl.u32 %v470, 16
    %v476 = vmul.u32 %v472, %v474
    %v477 = vmul.u32 %v472, %v475
    %v478 = vmul.u32 %v473, %v474
    %v479 = vmul.u32 %v473, %v475
    %v480 = vshll.u32 %v477, 16
    %v481 = vshrl.u32 %v477, 16
    %v482 = vshll.u32 %v478, 16
    %v483 = vshrl.u32 %v478, 16
    %vm484 = vc.u32 %v476, %v480
    %v485 = vsel %vm484, 1, 0
    %v486 = vadd.s32 %v476, %v480
    %v487 = vadd.s32 %v479, %v485
    %vm488 = vc.u32 %v486, %v482
    %v489 = vsel %vm488, 1, 0
    %v490 = vadd.s32 %v486, %v482
    %v491 = vadd.s32 %v487, %v489
    %v492 = vadd.s32 %v491, %v481
    %v493 = vadd.s32 %v492, %v483
    %v494 = vand.u32 %v471, 65535
    %v495 = vshrl.u32 %v471, 16
    %v496 = vand.u32 %v466, 65535
    %v497 = vshrl.u32 %v466, 16
    %v498 = vmul.u32 %v494, %v496
    %v499 = vmul.u32 %v494, %v497
    %v500 = vmul.u32 %v495, %v496
    %v501 = vmul.u32 %v495, %v497
    %v502 = vshll.u32 %v499, 16
    %v503 = vshrl.u32 %v499, 16
    %v504 = vshll.u32 %v500, 16
    %v505 = vshrl.u32 %v500, 16
    %vm506 = vc.u32 %v498, %v502
    %v507 = vsel %vm506, 1, 0
    %v508 = vadd.s32 %v498, %v502
    %v509 = vadd.s32 %v501, %v507
    %vm510 = vc.u32 %v508, %v504
    %v511 = vsel %vm510, 1, 0
    %v512 = vadd.s32 %v508, %v504
    %v513 = vadd.s32 %v509, %v511
    %v514 = vadd.s32 %v513, %v503
    %v515 = vadd.s32 %v514, %v505
    %v516 = vmul.u32 %v471, %v462
    %v517 = vadd.s32 %v493, %v512
    %vm518 = vc.u32 %v493, %v512
    %v519 = vadd.s32 %v515, 1
    %v520 = vsel %vm518, %v519, %v515
    %v521 = vadd.s32 %v516, %v520
    %v522 = vadd.s32 %v521, 536870912
    %v523 = vshrl.u32 %v522, 30
    %v524 = vshll.u32 %v523, 30
    %v525 = vsub.s32 %v521, %v524
    %vm526 = vcmp.lt.s32.totalorder %v525, 0
    %v527 = vsub.s32 0, %v525
    %v528 = vsel %vm526, %v527, %v525
    %v529 = vclz %v528
    %v530 = vsub.s32 %v529, 2
    %vm531 = vcmp.gt.s32.totalorder 0, %v530
    %v532 = vsel %vm531, 0, %v530
    %v533 = vsub.s32 32, %v532
    %v534 = vshll.u32 %v525, %v532
    %v535 = vshrl.u32 %v517, %v533
    %v536 = vor.u32 %v534, %v535
    %v537 = vsub.s32 4294967266, %v532
    %v538 = vadd.s32 %v537, 127
    %v539 = vshll.u32 %v538, 23
    %v540 = vor.u32 4788187, %v539
    %v541 = vand.u32 2147483647, %v540
    %v543 = vcvt.s32.f32 %v536
    %v544 = vmul.f32 %v543, %v541
    %v545 = vxor.u32 %v544, 2147483648
    %v546 = vsel %vm425, %v545, %v544
    %v547 = vsub.s32 4, %v523
    %v548 = vsel %vm425, %v547, %v523
    %v549 = vsel %vm424, %v259, %v546
    %v550 = vsel %vm424, 0, %v548
    %v551 = vmul.f32 %v549, %v549
    %v552 = vmul.f32 %v551, -0.001358992
    %v553 = vadd.f32 %v552, 0.041655596
    %v554 = vmul.f32 %v551, %v553
    %v555 = vadd.f32 %v554, -0.4999988
    %v556 = vmul.f32 %v551, %v555
    %v557 = vadd.f32 1.0, %v556
    %v558 = vmul.f32 %v549, %v549
    %v559 = vmul.f32 %v558, -0.00019511016
    %v560 = vadd.f32 %v559, 0.008332121
    %v561 = vmul.f32 %v558, %v560
    %v562 = vadd.f32 %v561, -0.16666654
    %v563 = vmul.f32 %v558, %v562
    %v564 = vadd.f32 %v563, 1.0
    %v565 = vmul.f32 %v564, %v549
    %vm566 = vweird.f32 %v259
    %v567 = vand.u32 %v550, 3
    %vm568 = vcmp.lt.s32.totalorder %v567, 2
    %vm569 = vcmp.eq.s32.totalorder %v567, 0
    %v570 = vxor.u32 %v565, 2147483648
    %v571 = vsel %vm569, %v557, %v570
    %vm572 = vcmp.eq.s32.totalorder %v567, 2
    %v573 = vxor.u32 %v557, 2147483648
    %v574 = vsel %vm572, %v573, %v565
    %v575 = vsel %vm568, %v571, %v574
    %v576 = vsel %vm566, nan, %v575
    %v577 = vand.u32 2147483647, %v263
    %vm578 = vcmp.le.f32.partialorder %v577, 0.7853982
    %vm579 = vcmp.lt.s32.totalorder %v263, 0
    %v580 = vand.u32 %v263, 2139095040
    %v581 = vshrl.u32 %v580, 23
    %v582 = vsub.s32 %v581, 127
    %v583 = vand.u32 2147483647, %v263
    %v584 = vand.u32 %v583, 8388607
    %v585 = vor.u32 %v584, 8388608
    %v586 = vsub.s32 0, %v585
    %v587 = vadd.s32 %v582, 1
    %vm588 = vcmp.gt.s32.totalorder %v587, 0
    %v589 = vsel %vm588, %v587, 0
    %v590 = vshrl.u32 %v589, 5
    %v591 = vand.u32 %v589, 31
    %v592 = vsub.s32 32, %v591
    %v593 = vshrl.u32 683565275, %v592
    %v594 = vshll.u32 683565275, %v591
    %v595 = vshrl.u32 2475754826, %v592
    %v596 = vor.u32 %v594, %v595
    %v597 = vshll.u32 2475754826, %v591
    %v598 = vshrl.u32 2131351028, %v592
    %v599 = vor.u32 %v597, %v598
    %v600 = vshll.u32 2131351028, %v591
    %v601 = vshrl.u32 2102212464, %v592
    %v602 = vor.u32 %v600, %v601
    %v603 = vshll.u32 2102212464, %v591
    %v604 = vshrl.u32 920167782, %v592
    %v605 = vor.u32 %v603, %v604
    %v606 = vshll.u32 920167782, %v591
    %v607 = vshrl.u32 1326507024, %v592
    %v608 = vor.u32 %v606, %v607
    %vm609 = vcmp.lt.s32.totalorder %v590, 1
    %vm610 = vcmp.lt.s32.totalorder %v590, 2
    %vm611 = vcmp.lt.s32.totalorder %v590, 3
    %vm612 = vcmp.lt.s32.totalorder %v590, 4
    %v613 = vsel %vm609, %v593, %v596
    %v614 = vsel %vm612, %v602, 2102212464
    %v615 = vsel %vm611, %v599, %v614
    %v616 = vsel %vm610, %v613, %v615
    %v617 = vsel %vm609, %v596, %v599
    %v618 = vsel %vm612, %v605, 920167782
    %v619 = vsel %vm611, %v602, %v618
    %v620 = vsel %vm610, %v617, %v619
    %v621 = vsel %vm609, %v599, %v602
    %v622 = vsel %vm612, %v608, 1326507024
    %v623 = vsel %vm611, %v605, %v622
    %v624 = vsel %vm610, %v621, %v623
    %v625 = vshll.u32 %v585, 8
    %v626 = vand.u32 %v625, 65535
    %v627 = vshrl.u32 %v625, 16
    %v628 = vand.u32 %v624, 65535
    %v629 = vshrl.u32 %v624, 16
    %v630 = vmul.u32 %v626, %v628
    %v631 = vmul.u32 %v626, %v629
    %v632 = vmul.u32 %v627, %v628
    %v633 = vmul.u32 %v627, %v629
    %v634 = vshll.u32 %v631, 16
    %v635 = vshrl.u32 %v631, 16
    %v636 = vshll.u32 %v632, 16
    %v637 = vshrl.u32 %v632, 16
    %vm638 = vc.u32 %v630, %v634
    %v639 = vsel %vm638, 1, 0
    %v640 = vadd.s32 %v630, %v634
    %v641 = vadd.s32 %v633, %v639
    %vm642 = vc.u32 %v640, %v636
    %v643 = vsel %vm642, 1, 0
    %v644 = vadd.s32 %v640, %v636
    %v645 = vadd.s32 %v641, %v643
    %v646 = vadd.s32 %v645, %v635
    %v647 = vadd.s32 %v646, %v637
    %v648 = vand.u32 %v625, 65535
    %v649 = vshrl.u32 %v625, 16
    %v650 = vand.u32 %v620, 65535
    %v651 = vshrl.u32 %v620, 16
    %v652 = vmul.u32 %v648, %v650
    %v653 = vmul.u32 %v648, %v651
    %v654 = vmul.u32 %v649, %v650
    %v655 = vmul.u32 %v649, %v651
    %v656 = vshll.u32 %v653, 16
    %v657 = vshrl.u32 %v653, 16
    %v658 = vshll.u32 %v654, 16
    %v659 = vshrl.u32 %v654, 16
    %vm660 = vc.u32 %v652, %v656
    %v661 = vsel %vm660, 1, 0
    %v662 = vadd.s32 %v652, %v656
    %v663 = vadd.s32 %v655, %v661
    %vm664 = vc.u32 %v662, %v658
    %v665 = vsel %vm664, 1, 0
    %v666 = vadd.s32 %v662, %v658
    %v667 = vadd.s32 %v663, %v665
    %v668 = vadd.s32 %v667, %v657
    %v669 = vadd.s32 %v668, %v659
    %v670 = vmul.u32 %v625, %v616
    %v671 = vadd.s32 %v647, %v666
    %vm672 = vc.u32 %v647, %v666
    %v673 = vadd.s32 %v669, 1
    %v674 = vsel %vm672, %v673, %v669
    %v675 = vadd.s32 %v670, %v674
    %v676 = vadd.s32 %v675, 536870912
    %v677 = vshrl.u32 %v676, 30
    %v678 = vshll.u32 %v677, 30
    %v679 = vsub.s32 %v675, %v678
    %vm680 = vcmp.lt.s32.totalorder %v679, 0
    %v681 = vsub.s32 0, %v679
    %v682 = vsel %vm680, %v681, %v679
    %v683 = vclz %v682
    %v684 = vsub.s32 %v683, 2
    %vm685 = vcmp.gt.s32.totalorder 0, %v684
    %v686 = vsel %vm685, 0, %v684
    %v687 = vsub.s32 32, %v686
    %v688 = vshll.u32 %v679, %v686
    %v689 = vshrl.u32 %v671, %v687
    %v690 = vor.u32 %v688, %v689
    %v691 = vsub.s32 4294967266, %v686
    %v692 = vadd.s32 %v691, 127
    %v693 = vshll.u32 %v692, 23
    %v694 = vor.u32 4788187, %v693
    %v695 = vand.u32 2147483647, %v694
    %v697 = vcvt.s32.f32 %v690
    %v698 = vmul.f32 %v697, %v695
    %v699 = vxor.u32 %v698, 2147483648
    %v700 = vsel %vm579, %v699, %v698
    %v701 = vsub.s32 4, %v677
    %v702 = vsel %vm579, %v701, %v677
    %v703 = vsel %vm578, %v263, %v700
    %v704 = vsel %vm578, 0, %v702
    %v705 = vmul.f32 %v703, %v703
    %v706 = vmul.f32 %v705, -0.001358992
    %v707 = vadd.f32 %v706, 0.041655596
    %v708 = vmul.f32 %v705, %v707
    %v709 = vadd.f32 %v708, -0.4999988
    %v710 = vmul.f32 %v705, %v709
    %v711 = vadd.f32 1.0, %v710
    %v712 = vmul.f32 %v703, %v703
    %v713 = vmul.f32 %v712, -0.00019511016
    %v714 = vadd.f32 %v713, 0.008332121
    %v715 = vmul.f32 %v712, %v714
    %v716 = vadd.f32 %v715, -0.16666654
    %v717 = vmul.f32 %v712, %v716
    %v718 = vadd.f32 %v717, 1.0
    %v719 = vmul.f32 %v718, %v703
    %vm720 = vweird.f32 %v263
    %v721 = vand.u32 %v704, 3
    %vm722 = vcmp.lt.s32.totalorder %v721, 2
    %vm723 = vcmp.eq.s32.totalorder %v721, 0
    %v724 = vxor.u32 %v719, 2147483648
    %v725 = vsel %vm723, %v711, %v724
    %vm726 = vcmp.eq.s32.totalorder %v721, 2
    %v727 = vxor.u32 %v711, 2147483648
    %v728 = vsel %vm726, %v727, %v719
    %v729 = vsel %vm722, %v725, %v728
    %v730 = vsel %vm720, nan, %v729
    %v731 = vand.u32 2147483647, %v267
    %vm732 = vcmp.le.f32.partialorder %v731, 0.7853982
    %vm733 = vcmp.lt.s32.totalorder %v267, 0
    %v734 = vand.u32 %v267, 2139095040
    %v735 = vshrl.u32 %v734, 23
    %v736 = vsub.s32 %v735, 127
    %v737 = vand.u32 2147483647, %v267
    %v738 = vand.u32 %v737, 8388607
    %v739 = vor.u32 %v738, 8388608
    %v740 = vsub.s32 0, %v739
    %v741 = vadd.s32 %v736, 1
    %vm742 = vcmp.gt.s32.totalorder %v741, 0
    %v743 = vsel %vm742, %v741, 0
    %v744 = vshrl.u32 %v743, 5
    %v745 = vand.u32 %v743, 31
    %v746 = vsub.s32 32, %v745
    %v747 = vshrl.u32 683565275, %v746
    %v748 = vshll.u32 683565275, %v745
    %v749 = vshrl.u32 2475754826, %v746
    %v750 = vor.u32 %v748, %v749
    %v751 = vshll.u32 2475754826, %v745
    %v752 = vshrl.u32 2131351028, %v746
    %v753 = vor.u32 %v751, %v752
    %v754 = vshll.u32 2131351028, %v745
    %v755 = vshrl.u32 2102212464, %v746
    %v756 = vor.u32 %v754, %v755
    %v757 = vshll.u32 2102212464, %v745
    %v758 = vshrl.u32 920167782, %v746
    %v759 = vor.u32 %v757, %v758
    %v760 = vshll.u32 920167782, %v745
    %v761 = vshrl.u32 1326507024, %v746
    %v762 = vor.u32 %v760, %v761
    %vm763 = vcmp.lt.s32.totalorder %v744, 1
    %vm764 = vcmp.lt.s32.totalorder %v744, 2
    %vm765 = vcmp.lt.s32.totalorder %v744, 3
    %vm766 = vcmp.lt.s32.totalorder %v744, 4
    %v767 = vsel %vm763, %v747, %v750
    %v768 = vsel %vm766, %v756, 2102212464
    %v769 = vsel %vm765, %v753, %v768
    %v770 = vsel %vm764, %v767, %v769
    %v771 = vsel %vm763, %v750, %v753
    %v772 = vsel %vm766, %v759, 920167782
    %v773 = vsel %vm765, %v756, %v772
    %v774 = vsel %vm764, %v771, %v773
    %v775 = vsel %vm763, %v753, %v756
    %v776 = vsel %vm766, %v762, 1326507024
    %v777 = vsel %vm765, %v759, %v776
    %v778 = vsel %vm764, %v775, %v777
    %v779 = vshll.u32 %v739, 8
    %v780 = vand.u32 %v779, 65535
    %v781 = vshrl.u32 %v779, 16
    %v782 = vand.u32 %v778, 65535
    %v783 = vshrl.u32 %v778, 16
    %v784 = vmul.u32 %v780, %v782
    %v785 = vmul.u32 %v780, %v783
    %v786 = vmul.u32 %v781, %v782
    %v787 = vmul.u32 %v781, %v783
    %v788 = vshll.u32 %v785, 16
    %v789 = vshrl.u32 %v785, 16
    %v790 = vshll.u32 %v786, 16
    %v791 = vshrl.u32 %v786, 16
    %vm792 = vc.u32 %v784, %v788
    %v793 = vsel %vm792, 1, 0
    %v794 = vadd.s32 %v784, %v788
    %v795 = vadd.s32 %v787, %v793
    %vm796 = vc.u32 %v794, %v790
    %v797 = vsel %vm796, 1, 0
    %v798 = vadd.s32 %v794, %v790
    %v799 = vadd.s32 %v795, %v797
    %v800 = vadd.s32 %v799, %v789
    %v801 = vadd.s32 %v800, %v791
    %v802 = vand.u32 %v779, 65535
    %v803 = vshrl.u32 %v779, 16
    %v804 = vand.u32 %v774, 65535
    %v805 = vshrl.u32 %v774, 16
    %v806 = vmul.u32 %v802, %v804
    %v807 = vmul.u32 %v802, %v805
    %v808 = vmul.u32 %v803, %v804
    %v809 = vmul.u32 %v803, %v805
    %v810 = vshll.u32 %v807, 16
    %v811 = vshrl.u32 %v807, 16
    %v812 = vshll.u32 %v808, 16
    %v813 = vshrl.u32 %v808, 16
    %vm814 = vc.u32 %v806, %v810
    %v815 = vsel %vm814, 1, 0
    %v816 = vadd.s32 %v806, %v810
    %v817 = vadd.s32 %v809, %v815
    %vm818 = vc.u32 %v816, %v812
    %v819 = vsel %vm818, 1, 0
    %v820 = vadd.s32 %v816, %v812
    %v821 = vadd.s32 %v817, %v819
    %v822 = vadd.s32 %v821, %v811
    %v823 = vadd.s32 %v822, %v813
    %v824 = vmul.u32 %v779, %v770
    %v825 = vadd.s32 %v801, %v820
    %vm826 = vc.u32 %v801, %v820
    %v827 = vadd.s32 %v823, 1
    %v828 = vsel %vm826, %v827, %v823
    %v829 = vadd.s32 %v824, %v828
    %v830 = vadd.s32 %v829, 536870912
    %v831 = vshrl.u32 %v830, 30
    %v832 = vshll.u32 %v831, 30
    %v833 = vsub.s32 %v829, %v832
    %vm834 = vcmp.lt.s32.totalorder %v833, 0
    %v835 = vsub.s32 0, %v833
    %v836 = vsel %vm834, %v835, %v833
    %v837 = vclz %v836
    %v838 = vsub.s32 %v837, 2
    %vm839 = vcmp.gt.s32.totalorder 0, %v838
    %v840 = vsel %vm839, 0, %v838
    %v841 = vsub.s32 32, %v840
    %v842 = vshll.u32 %v833, %v840
    %v843 = vshrl.u32 %v825, %v841
    %v844 = vor.u32 %v842, %v843
    %v845 = vsub.s32 4294967266, %v840
    %v846 = vadd.s32 %v845, 127
    %v847 = vshll.u32 %v846, 23
    %v848 = vor.u32 4788187, %v847
    %v849 = vand.u32 2147483647, %v848
    %v851 = vcvt.s32.f32 %v844
    %v852 = vmul.f32 %v851, %v849
    %v853 = vxor.u32 %v852, 2147483648
    %v854 = vsel %vm733, %v853, %v852
    %v855 = vsub.s32 4, %v831
    %v856 = vsel %vm733, %v855, %v831
    %v857 = vsel %vm732, %v267, %v854
    %v858 = vsel %vm732, 0, %v856
    %v859 = vmul.f32 %v857, %v857
    %v860 = vmul.f32 %v859, -0.001358992
    %v861 = vadd.f32 %v860, 0.041655596
    %v862 = vmul.f32 %v859, %v861
    %v863 = vadd.f32 %v862, -0.4999988
    %v864 = vmul.f32 %v859, %v863
    %v865 = vadd.f32 1.0, %v864
    %v866 = vmul.f32 %v857, %v857
    %v867 = vmul.f32 %v866, -0.00019511016
    %v868 = vadd.f32 %v867, 0.008332121
    %v869 = vmul.f32 %v866, %v868
    %v870 = vadd.f32 %v869, -0.16666654
    %v871 = vmul.f32 %v866, %v870
    %v872 = vadd.f32 %v871, 1.0
    %v873 = vmul.f32 %v872, %v857
    %vm874 = vweird.f32 %v267
    %v875 = vand.u32 %v858, 3
    %vm876 = vcmp.lt.s32.totalorder %v875, 2
    %vm877 = vcmp.eq.s32.totalorder %v875, 0
    %v878 = vxor.u32 %v873, 2147483648
    %v879 = vsel %vm877, %v865, %v878
    %vm880 = vcmp.eq.s32.totalorder %v875, 2
    %v881 = vxor.u32 %v865, 2147483648
    %v882 = vsel %vm880, %v881, %v873
    %v883 = vsel %vm876, %v879, %v882
    %v884 = vsel %vm874, nan, %v883
    %885 = vst [vmem:[#allocation2] sm:$0xff] %v422
    %886 = vst [vmem:[#allocation2 + $0x8] sm:$0xff] %v576
    %887 = vst [vmem:[#allocation2 + $0x10] sm:$0xff] %v730
    %888 = vst [vmem:[#allocation2 + $0x18] sm:$0xff] %v884
    // Predicated region
    $region10: #{tpu_custom_call.1} parent=1 // pred_check
      _
    $region11: #{tpu_custom_call.1} parent=1 // pred_check_branch
      %890 = sbr.rel (0) target = $region13
    $region12: #{tpu_custom_call.1} parent=1 // pred_region
      %892 = vsyncadd [#allocation3], 0
      %s893 = sshll.u32 [#allocation2], 4
      %s894 = int_to_ptr.vmem [resolvable:$true] %s893
      %s895 = sshll.u32 %s2, 4
      %s896 = int_to_ptr.hbm [resolvable:$true] %s895
      %901 = dma.vmem_to_hbm [thread:$0]  %s894, 512, %s896, [#allocation3], 128, 128, 8
    $region13: #{tpu_custom_call.1} parent=1 // pred_fallthru
      _
    // Predicated region
    $region14: #{tpu_custom_call.1} parent=1 // pred_check
      _
    $region15: #{tpu_custom_call.1} parent=1 // pred_check_branch
      %903 = sbr.rel (0) target = $region17
    $region16: #{tpu_custom_call.1} parent=1 // pred_region
      %905 = dma.done [#allocation3], 512
    $region17: #{tpu_custom_call.1} parent=1 // pred_fallthru
      _
    %906 = vsyncpa [#allocation3], 1

</llo_original>
